<compile_context>
chip_gen: v5e
topology: v5e:2x2
jax: 0.10.0
libtpu: 0.0.40
codegen_flags: <defaults>
</compile_context>

<pallas_src>
import numpy as np
import jax
import jax.numpy as jnp
from jax.experimental import pallas as pl
from jax.experimental.pallas import tpu as pltpu


def _conv1x1_kernel(w_ref, x_ref, o_ref):
    # w_ref: (C, C) weight, x_ref / o_ref: (C, hw_tile) slab (batch dim squeezed).
    o_ref[...] = jnp.dot(
        w_ref[...], x_ref[...], preferred_element_type=jnp.float32
    ).astype(o_ref.dtype)


def _pick_hw_tile(HW, C, itemsize):
    """Lane-dense spatial tile.

    - If the whole spatial extent is small, use it as one full-extent block
      (always legal w.r.t. the (8,128) rule, zero raggedness).
    - Otherwise use a 256-aligned tile (MXU width on v6e/v7x; >=128 for v5e),
      capped at 2048 lanes and by an ~8 MiB activation-buffer budget so the
      double-buffered in+out blocks stay well inside the 32 MiB scoped-VMEM
      limit that is safe on all generations (v7x physical VMEM is only 64 MiB).
    """
    if HW <= 2048:
        return HW
    budget = 8 * 1024 * 1024                    # bytes for 2x(in + out) blocks
    by_vmem = budget // (4 * C * itemsize)
    tile = min(2048, by_vmem, HW)
    tile = max(256, (tile // 256) * 256)
    return int(tile)


def invertible_conv1x1_forward(x_nchw, weight, logdet=None, reverse=False):
    """Pallas implementation of InvertibleConv1x1.forward (non-LU path)."""
    N, C, H, W = x_nchw.shape
    pixels = H * W

    # --- glue: slogdet / inverse of the tiny CxC weight (not the hot path) ---
    # Keep the CxC math in float32 even if activations are lower precision.
    w32 = weight.astype(jnp.float32)
    _, logabsdet = jnp.linalg.slogdet(w32)
    dlogdet = logabsdet * pixels

    if reverse:
        # TODO(synk): PyTorch inverts in float64; JAX default config is f32-only,
        # so the tiny CxC inverse is computed in float32 here.
        w_eff = jnp.linalg.inv(w32)
    else:
        w_eff = w32
    w_eff = w_eff.astype(x_nchw.dtype)

    # NCHW viewed as (N, C, HW): free reshape, no transpose/pad HBM traffic.
    HW = pixels
    x3 = x_nchw.reshape(N, C, HW)

    itemsize = jnp.dtype(x_nchw.dtype).itemsize
    hw_tile = _pick_hw_tile(HW, C, itemsize)
    n_hw = pl.cdiv(HW, hw_tile)

    cost = pl.CostEstimate(
        flops=2 * N * HW * C * C,
        transcendentals=0,
        bytes_accessed=(2 * N * C * HW + C * C) * itemsize,
    )

    z3 = pl.pallas_call(
        _conv1x1_kernel,
        out_shape=jax.ShapeDtypeStruct((N, C, HW), x_nchw.dtype),
        grid_spec=pltpu.PrefetchScalarGridSpec(
            num_scalar_prefetch=0,
            grid=(N, n_hw),
            in_specs=[
                # Whole CxC weight; constant block index -> resident, no re-DMA.
                pl.BlockSpec((C, C), lambda n, j: (0, 0)),
                # (C, hw_tile) slab per (batch, spatial-tile); batch dim squeezed.
                pl.BlockSpec((None, C, hw_tile), lambda n, j: (n, 0, j)),
            ],
            out_specs=pl.BlockSpec((None, C, hw_tile), lambda n, j: (n, 0, j)),
        ),
        compiler_params=pltpu.CompilerParams(
            dimension_semantics=("parallel", "parallel"),
            vmem_limit_bytes=32 * 1024 * 1024,
        ),
        cost_estimate=cost,
    )(w_eff, x3)

    z = z3.reshape(N, C, H, W)

    if logdet is not None:
        logdet = logdet - dlogdet if reverse else logdet + dlogdet
    return z, logdet


if __name__ == "__main__":
    key = jax.random.PRNGKey(0)
    kx, kw = jax.random.split(key)

    # Module __init__: w_shape = [num_channels, num_channels], QR-orthogonal init.
    N, C, H, W = 2, 4, 16, 16
    w_rand = np.asarray(jax.random.normal(kw, (C, C), dtype=jnp.float32))
    w_init = np.linalg.qr(w_rand)[0].astype(np.float32)
    weight = jnp.asarray(w_init)

    x = jax.random.normal(kx, (N, C, H, W), dtype=jnp.float32)
    logdet0 = jnp.zeros((N,), dtype=jnp.float32)

    # Forward
    z, logdet = invertible_conv1x1_forward(x, weight, logdet=logdet0, reverse=False)
    z = jax.block_until_ready(z)
    logdet = jax.block_until_ready(logdet)

    # Reference check (plain JAX) of the conv path and logdet.
    z_ref = jnp.einsum("oc,nchw->nohw", weight, x)
    assert jnp.allclose(z, z_ref, atol=1e-5), "conv1x1 kernel mismatch"
    ld_ref = logdet0 + jnp.linalg.slogdet(weight)[1] * (H * W)
    assert jnp.allclose(logdet, ld_ref, atol=1e-5), "logdet mismatch"

    # Reverse path round-trip: x -> z -> x, logdet returns to its initial value.
    x_rec, logdet_rt = invertible_conv1x1_forward(z, weight, logdet=logdet, reverse=True)
    x_rec = jax.block_until_ready(x_rec)
    logdet_rt = jax.block_until_ready(logdet_rt)
    assert jnp.allclose(x_rec, x, atol=1e-4), "reverse round-trip mismatch"
    assert jnp.allclose(logdet_rt, logdet0, atol=1e-4), "reverse logdet mismatch"

    print("KERNEL_OK")
</pallas_src>

<mosaic_0001>
module attributes {stable_mosaic.version = 11 : i64} {
  func.func @_conv1x1_kernel(%arg0: i32, %arg1: i32, %arg2: memref<4x4xf32, #tpu.memory_space<vmem>>, %arg3: memref<1x4x256xf32, #tpu.memory_space<vmem>>, %arg4: memref<1x4x256xf32, #tpu.memory_space<vmem>>) attributes {dimension_semantics = [#tpu.dimension_semantics<parallel>, #tpu.dimension_semantics<parallel>], iteration_bounds = array<i64: 2, 1>, scalar_prefetch = 0 : i64, scratch_operands = 0 : i64, tpu.core_type = #tpu.core_type<tc>, window_params = [{pipeline_mode = #tpu.pipeline_mode<synchronous>, transform_indices = @transform_0, window_bounds = array<i64: 4, 4>}, {transform_indices = @transform_1, window_bounds = array<i64: 1, 4, 256>}, {transform_indices = @transform_2, window_bounds = array<i64: 1, 4, 256>}]} {
    %c0 = arith.constant 0 : index
    %c0_0 = arith.constant 0 : index
    %0 = vector.load %arg2[%c0, %c0_0] : memref<4x4xf32, #tpu.memory_space<vmem>>, vector<4x4xf32>
    %c0_1 = arith.constant 0 : index
    %c0_2 = arith.constant 0 : index
    %c0_3 = arith.constant 0 : index
    %1 = vector.load %arg3[%c0_1, %c0_2, %c0_3] : memref<1x4x256xf32, #tpu.memory_space<vmem>>, vector<1x4x256xf32>
    %2 = vector.shape_cast %1 : vector<1x4x256xf32> to vector<4x256xf32>
    %cst = arith.constant dense<0.000000e+00> : vector<4x256xf32>
    %3 = tpu.matmul %0, %2, %cst {dimension_numbers = #tpu.dot_dimension_numbers<[1], [0], [0], [1], [0, 0, 1, 1], [], []>} : vector<4x4xf32>, vector<4x256xf32>, vector<4x256xf32> -> vector<4x256xf32>
    %c0_4 = arith.constant 0 : index
    %c0_5 = arith.constant 0 : index
    %c0_6 = arith.constant 0 : index
    %4 = vector.load %arg4[%c0_4, %c0_5, %c0_6] : memref<1x4x256xf32, #tpu.memory_space<vmem>>, vector<1x4x256xf32>
    %5 = vector.shape_cast %4 : vector<1x4x256xf32> to vector<4x256xf32>
    %6 = vector.shape_cast %3 : vector<4x256xf32> to vector<1x4x256xf32>
    tpu.vector_store %arg4[%c0_4, %c0_5, %c0_6], %6 {strides = array<i32>} : memref<1x4x256xf32, #tpu.memory_space<vmem>>, vector<1x4x256xf32>,
    return
  }
  func.func @transform_0(%arg0: i32, %arg1: i32) -> (i32, i32) {
    %c0_i32 = arith.constant 0 : i32
    %c0_i32_0 = arith.constant 0 : i32
    %c0_i32_1 = arith.constant 0 : i32
    return %c0_i32, %c0_i32_0 : i32, i32
  }
  func.func @transform_1(%arg0: i32, %arg1: i32) -> (i32, i32, i32) {
    %c0_i32 = arith.constant 0 : i32
    %c0_i32_0 = arith.constant 0 : i32
    return %arg0, %c0_i32, %arg1 : i32, i32, i32
  }
  func.func @transform_2(%arg0: i32, %arg1: i32) -> (i32, i32, i32) {
    %c0_i32 = arith.constant 0 : i32
    %c0_i32_0 = arith.constant 0 : i32
    return %arg0, %c0_i32, %arg1 : i32, i32, i32
  }
}

</mosaic_0001>

<llo_original>
// kernel: tpu_custom_call.1
$region0: #{tpu_custom_call.1}
  #allocation0 [shape = 'u32[]', space=smem, size = 0x4, offset = 0x4, fixed_abs, tag = 'smem constant byte address 0x4 - core index']
  #allocation1 [shape = 'u32[72,128]{1,0:T(1,128)}', space=vmem, size = 0x9000, scoped, tag = 'internal scratch']
  %s0 = inlined_call_operand.hbm [shape: f32[4,4], index: 0, kind: input, shape index: {}]
  %s1 = inlined_call_operand.hbm [shape: f32[2,4,256], index: 1, kind: input, shape index: {}]
  %s2 = inlined_call_operand.hbm [shape: f32[2,4,256], index: 2, kind: output, shape index: {}]
  %s3 = sld [smem:[#allocation0]]
  $region49: #{tpu_custom_call.1} parent=0
    _
  %s5 = ssub.s32 1, %s3
  %s6 = scalar_select 0, %s5, %s3
  $region1: #{tpu_custom_call.1} parent=0
    #allocation2 [shape = 'u8[2048]{0}', space=vmem, size = 0x800, scoped, tag = 'input window, operand 0, single buffered']
    #allocation3 [shape = 's32[2]{0}', space=sflag, size = 0x8, scoped, tag = 'scoped memory for tpu_custom_call.1']
    #allocation4 [shape = 's32[2]{0}', space=sflag, size = 0x8, scoped, tag = 'scoped memory for tpu_custom_call.1']
    #allocation5 [shape = 'u8[8192]{0}', space=vmem, size = 0x2000, scoped, tag = 'input window, operand 1']
    #allocation6 [shape = 's32[2]{0}', space=sflag, size = 0x8, scoped, tag = 'scoped memory for tpu_custom_call.1']
    #allocation7 [shape = 'u8[8192]{0}', space=vmem, size = 0x2000, scoped, tag = 'output window, operand 0']
    %7 = vsyncpa [#allocation3], 0
    %8 = vsyncpa [#allocation6], 0
    %s9 = scalar_lea.sflag [#allocation6], 1
    %10 = vsyncpa %s9, 0
    %11 = vsyncpa [#allocation4], 0
    %s12 = scalar_lea.sflag [#allocation4], 1
    %13 = vsyncpa %s12, 0
    loop: start=0, step=1, limit=4
    $region2: #{tpu_custom_call.1} parent=1 // loop_pre_header
      _
    $region3: #{tpu_custom_call.1} parent=1 // loop_header
      %s15 = sphi 0, %s19
      %p16 = scmp.ge.s32.totalorder %s15, 4
      %s22 = sphi 0, %s34
      %s23 = sphi 0, %s30
      %s24 = sphi 0, %s22
      %s25 = sphi 0, %s23
      %s26 = sphi 0, %s24
      %s27 = sphi 0, %s25
      %s35 = sphi 0, %s35
      %s37 = sphi 0, %s35
      %s38 = sphi 0, %s37
      %s52 = sphi 0, %s38
      %s60 = sphi 0, %s62
      %s63 = sphi 0, %s60
      %s64 = sphi 0, %s63
      %s80 = sphi 0, %s64
      %s88 = sphi 0, %s90
      %s91 = sphi 0, %s88
      %s92 = sphi 0, %s91
      %s108 = sphi 0, %s92
    $region4: #{tpu_custom_call.1} parent=1 // loop_header_branch
      %18 = sbr.rel (%p16) target = $region8
    $region5: #{tpu_custom_call.1} parent=1 // loop_body
      %s20 = ssub.s32 %s15, 1
      %s21 = ssub.s32 %s15, 2
      %s28 = sadd.s32 1, %s23
      %p29 = scmp.ge.s32.totalorder %s28, 1
      %s30 = scalar_select %p29, 0, %s28
      %s31 = sadd.s32 1, %s22
      %s32 = scalar_select %p29, %s31, %s22
      %p33 = scmp.ge.s32.totalorder %s32, 2
      %s34 = scalar_select %p33, 0, %s32
      %s36 = sadd.s32 %s35, 1
      %p39 = scmp.eq.s32.totalorder %s15, 1
      %p40 = scmp.ne.s32.totalorder %s35, %s37
      %p41 = scmp.eq.s32.totalorder %s15, 0
      %p42 = por %p40, %p41
      %p43 = scmp.ne.s32.totalorder %s35, %s37
      %p44 = scmp.eq.s32.totalorder %s20, 1
      %p45 = por %p43, %p44
      %p46 = scmp.ne.s32.totalorder %s37, %s38
      %p47 = scmp.eq.s32.totalorder %s20, 0
      %p48 = por %p46, %p47
      %p49 = scmp.ne.s32.totalorder %s37, %s38
      %p50 = scmp.eq.s32.totalorder %s21, 1
      %p51 = por %p49, %p50
      %p53 = scmp.ne.s32.totalorder %s38, %s52
      %p54 = scmp.eq.s32.totalorder %s21, 0
      %p55 = por %p53, %p54
      %s56 = ssub.s32 %s22, %s34
      %s57 = ssub.s32 %s23, %s30
      %s58 = sor.u32 %s56, %s57
      %p59 = scmp.eq.s32.totalorder %s58, 0
      %s61 = sadd.s32 %s60, 1
      %s62 = scalar_select %p59, %s60, %s61
      %p65 = pneg %p59
      %p66 = scmp.eq.s32.totalorder %s15, 1
      %p67 = por %p65, %p66
      %p68 = scmp.ne.s32.totalorder %s60, %s63
      %p69 = scmp.eq.s32.totalorder %s15, 0
      %p70 = por %p68, %p69
      %p71 = scmp.ne.s32.totalorder %s60, %s63
      %p72 = scmp.eq.s32.totalorder %s20, 1
      %p73 = por %p71, %p72
      %p74 = scmp.ne.s32.totalorder %s63, %s64
      %p75 = scmp.eq.s32.totalorder %s20, 0
      %p76 = por %p74, %p75
      %p77 = scmp.ne.s32.totalorder %s63, %s64
      %p78 = scmp.eq.s32.totalorder %s21, 1
      %p79 = por %p77, %p78
      %p81 = scmp.ne.s32.totalorder %s64, %s80
      %p82 = scmp.eq.s32.totalorder %s21, 0
      %p83 = por %p81, %p82
      %s84 = ssub.s32 %s22, %s34
      %s85 = ssub.s32 %s23, %s30
      %s86 = sor.u32 %s84, %s85
      %p87 = scmp.eq.s32.totalorder %s86, 0
      %s89 = sadd.s32 %s88, 1
      %s90 = scalar_select %p87, %s88, %s89
      %p93 = pneg %p87
      %p94 = scmp.eq.s32.totalorder %s15, 1
      %p95 = por %p93, %p94
      %p96 = scmp.ne.s32.totalorder %s88, %s91
      %p97 = scmp.eq.s32.totalorder %s15, 0
      %p98 = por %p96, %p97
      %p99 = scmp.ne.s32.totalorder %s88, %s91
      %p100 = scmp.eq.s32.totalorder %s20, 1
      %p101 = por %p99, %p100
      %p102 = scmp.ne.s32.totalorder %s91, %s92
      %p103 = scmp.eq.s32.totalorder %s20, 0
      %p104 = por %p102, %p103
      %p105 = scmp.ne.s32.totalorder %s91, %s92
      %p106 = scmp.eq.s32.totalorder %s21, 1
      %p107 = por %p105, %p106
      %p109 = scmp.ne.s32.totalorder %s92, %s108
      %p110 = scmp.eq.s32.totalorder %s21, 0
      %p111 = por %p109, %p110
      %p112 = scmp.le.s32.totalorder 1, %s15
      %p113 = scmp.lt.s32.totalorder %s15, 3
      %p114 = pnand %p112, %p113
      %p115 = pneg %p114
      // Predicated region
      $region9: #{tpu_custom_call.1} parent=5 // pred_check
        _
      $region10: #{tpu_custom_call.1} parent=5 // pred_check_branch
        %117 = sbr.rel (%p114) target = $region12
      $region11: #{tpu_custom_call.1} parent=5 // pred_region
        %s118 = ssub.s32 %s15, 1
        // Predicated region
        $region13: #{tpu_custom_call.1} parent=11 // pred_check
          %p119 = pneg %p48
        $region14: #{tpu_custom_call.1} parent=11 // pred_check_branch
          %121 = sbr.rel (%p119) target = $region16
        $region15: #{tpu_custom_call.1} parent=11 // pred_region
          %123 = vsyncadd [#allocation3], 0
          %s125 = sshll.u32 %s0, 4
          %s126 = int_to_ptr.hbm [resolvable:$true] %s125
          %s127 = sshll.u32 [#allocation2], 4
          %s128 = int_to_ptr.vmem [resolvable:$true] %s127
          %130 = dma.hbm_to_vmem [thread:$0]  %s126, 64, %s128, [#allocation3]
        $region16: #{tpu_custom_call.1} parent=11 // pred_fallthru
          _
      $region12: #{tpu_custom_call.1} parent=5 // pred_fallthru
        _
      %p131 = scmp.lt.s32.totalorder %s15, 2
      // Predicated region
      $region17: #{tpu_custom_call.1} parent=5 // pred_check
        %p132 = pneg %p131
      $region18: #{tpu_custom_call.1} parent=5 // pred_check_branch
        %134 = sbr.rel (%p132) target = $region20
      $region19: #{tpu_custom_call.1} parent=5 // pred_region
        // Predicated region
        $region21: #{tpu_custom_call.1} parent=19 // pred_check
          %p135 = pneg %p70
        $region22: #{tpu_custom_call.1} parent=19 // pred_check_branch
          %137 = sbr.rel (%p135) target = $region24
        $region23: #{tpu_custom_call.1} parent=19 // pred_region
          %s138 = sand.u32 %s60, 1
          %s139 = scalar_lea.sflag [#allocation6], %s138
          %s140 = sand.u32 %s60, 1
          %s141 = smul.addr %s140, 8
          %s142 = scalar_lea.vmem [#allocation5], %s141
          %s143 = smul.u32 2, %s23
          %145 = vsyncadd %s139, 0
          %s146 = smul.addr %s22, 2
          %s147 = sadd.s32 %s143, %s146
          %s148 = smul.addr %s147, 4
          %s149 = scalar_lea.hbm %s1, %s148
          %s151 = sshll.u32 %s149, 4
          %s152 = int_to_ptr.hbm [resolvable:$true] %s151
          %s153 = sshll.u32 %s142, 4
          %s154 = int_to_ptr.vmem [resolvable:$true] %s153
          %156 = dma.hbm_to_vmem [thread:$0]  %s152, 128, %s154, %s139
        $region24: #{tpu_custom_call.1} parent=19 // pred_fallthru
          _
      $region20: #{tpu_custom_call.1} parent=5 // pred_fallthru
        _
      %p157 = scmp.le.s32.totalorder 1, %s15
      %p158 = scmp.lt.s32.totalorder %s15, 3
      %p159 = pnand %p157, %p158
      %p160 = pneg %p159
      // Predicated region
      $region25: #{tpu_custom_call.1} parent=5 // pred_check
        _
      $region26: #{tpu_custom_call.1} parent=5 // pred_check_branch
        %162 = sbr.rel (%p159) target = $region28
      $region27: #{tpu_custom_call.1} parent=5 // pred_region
        %s163 = ssub.s32 %s15, 1
        // Predicated region
        $region29: #{tpu_custom_call.1} parent=27 // pred_check
          %p164 = pneg %p48
        $region30: #{tpu_custom_call.1} parent=27 // pred_check_branch
          %166 = sbr.rel (%p164) target = $region32
        $region31: #{tpu_custom_call.1} parent=27 // pred_region
          %168 = dma.done [#allocation3], 64
        $region32: #{tpu_custom_call.1} parent=27 // pred_fallthru
          _
        %s169 = sand.u32 %s63, 1
        %s170 = scalar_lea.sflag [#allocation6], %s169
        %s171 = sand.u32 %s63, 1
        %s172 = smul.addr %s171, 8
        %s173 = scalar_lea.vmem [#allocation5], %s172
        // Predicated region
        $region33: #{tpu_custom_call.1} parent=27 // pred_check
          %p174 = pneg %p76
        $region34: #{tpu_custom_call.1} parent=27 // pred_check_branch
          %176 = sbr.rel (%p174) target = $region36
        $region35: #{tpu_custom_call.1} parent=27 // pred_region
          %178 = dma.done %s170, 128
        $region36: #{tpu_custom_call.1} parent=27 // pred_fallthru
          _
        %p179 = pneg %p48
        %p180 = pneg %p45
        %s181 = sand.u32 %s63, 1
        %s182 = scalar_lea.sflag [#allocation6], %s181
        %s183 = sand.u32 %s63, 1
        %s184 = smul.addr %s183, 8
        %s185 = scalar_lea.vmem [#allocation5], %s184
        %p186 = pneg %p76
        %p187 = pneg %p73
        %p188 = pneg %p104
        %p189 = pneg %p101
        %s190 = sand.u32 %s91, 1
        %s191 = scalar_lea.sflag [#allocation4], %s190
        %s192 = sand.u32 %s91, 1
        %s193 = smul.addr %s192, 8
        %s194 = scalar_lea.vmem [#allocation7], %s193
        %s195 = smul.u32 2, %s25
        %s196 = smul.u32 2, %s25
        %v197 = vld [vmem:[#allocation2] sm:$0xf]
        %v198 = vld [vmem:[%s173] sm:$0xff]
        %200 = vst [vmem:[#allocation1] ss:$2 sm:$0xff] %v198
        %v201 = vld.sshfl [vmem:[#allocation1] sm:$0xff pattern:$0x75316420]
        %v202 = vld.sshfl [vmem:[#allocation1 + $0x8] sm:$0xff pattern:$0x75316420]
        %vm203 = vcmask 31744
        %v205 = vsel %vm203, %v197, 0
        %vm207 = vcmask 1043456
        %v208 = vsel %vm207, %v201, 0
        %v210 = vsel %vm207, %v202, 0
        %212 = vmatpush.msra.mxu0 0.0
        %213 = vmatpush.msra.mxu0 0.0
        %214 = vmatpush.msra.mxu0 0.0
        %215 = vmatpush.msra.mxu0 0.0
        %216 = vmatpush.msra.mxu0 0.0
        %217 = vmatpush.msra.mxu0 0.0
        %218 = vmatpush.msra.mxu0 0.0
        %219 = vmatpush.msra.mxu0 0.0
        %220 = vmatpush.msra.mxu0 0.0
        %221 = vmatpush.msra.mxu0 0.0
        %222 = vmatpush.msra.mxu0 0.0
        %223 = vmatpush.msra.mxu0 0.0
        %224 = vmatpush.msra.mxu0 0.0
        %225 = vmatpush.msra.mxu0 0.0
        %226 = vmatpush.msra.mxu0 0.0
        %227 = vmatpush.msra.mxu0 %v208
        %228 = vmatmul.f32.gmra.mxu0 %v205
        %v229 = vpop.f32.mrf.mxu0
        %v230 = vadd.f32 0.0, %v229
        %231 = vdwg.mxu0
        %232 = vmatpush.msra.mxu0 0.0
        %233 = vmatpush.msra.mxu0 0.0
        %234 = vmatpush.msra.mxu0 0.0
        %235 = vmatpush.msra.mxu0 0.0
        %236 = vmatpush.msra.mxu0 0.0
        %237 = vmatpush.msra.mxu0 0.0
        %238 = vmatpush.msra.mxu0 0.0
        %239 = vmatpush.msra.mxu0 0.0
        %240 = vmatpush.msra.mxu0 0.0
        %241 = vmatpush.msra.mxu0 0.0
        %242 = vmatpush.msra.mxu0 0.0
        %243 = vmatpush.msra.mxu0 0.0
        %244 = vmatpush.msra.mxu0 0.0
        %245 = vmatpush.msra.mxu0 0.0
        %246 = vmatpush.msra.mxu0 0.0
        %247 = vmatpush.msra.mxu0 %v210
        %248 = vmatmul.f32.gmra.mxu0 %v205
        %v249 = vpop.f32.mrf.mxu0
        %v250 = vadd.f32 0.0, %v249
        %251 = vdwg.mxu0
        %v254 = vrot.slane %v250, 4
        %v255 = vsel %vm207, %v230, %v254
        %257 = vst [vmem:[%s194] sm:$0xff] %v255
        %s258 = sand.u32 %s91, 1
        %s259 = scalar_lea.sflag [#allocation4], %s258
        %s260 = sand.u32 %s91, 1
        %s261 = smul.addr %s260, 8
        %s262 = scalar_lea.vmem [#allocation7], %s261
        // Predicated region
        $region37: #{tpu_custom_call.1} parent=27 // pred_check
          %p263 = pneg %p101
        $region38: #{tpu_custom_call.1} parent=27 // pred_check_branch
          %265 = sbr.rel (%p263) target = $region40
        $region39: #{tpu_custom_call.1} parent=27 // pred_region
          %s266 = smul.u32 2, %s25
          %268 = vsyncadd %s259, 0
          %s269 = smul.addr %s24, 2
          %s270 = sadd.s32 %s266, %s269
          %s271 = smul.addr %s270, 4
          %s272 = scalar_lea.hbm %s2, %s271
          %s274 = sshll.u32 %s262, 4
          %s275 = int_to_ptr.vmem [resolvable:$true] %s274
          %s276 = sshll.u32 %s272, 4
          %s277 = int_to_ptr.hbm [resolvable:$true] %s276
          %279 = dma.vmem_to_hbm [thread:$0]  %s275, 128, %s277, %s259
        $region40: #{tpu_custom_call.1} parent=27 // pred_fallthru
          _
      $region28: #{tpu_custom_call.1} parent=5 // pred_fallthru
        _
      %p280 = scmp.le.s32.totalorder 2, %s15
      // Predicated region
      $region41: #{tpu_custom_call.1} parent=5 // pred_check
        %p281 = pneg %p280
      $region42: #{tpu_custom_call.1} parent=5 // pred_check_branch
        %283 = sbr.rel (%p281) target = $region44
      $region43: #{tpu_custom_call.1} parent=5 // pred_region
        %s284 = ssub.s32 %s15, 2
        // Predicated region
        $region45: #{tpu_custom_call.1} parent=43 // pred_check
          %p285 = pneg %p107
        $region46: #{tpu_custom_call.1} parent=43 // pred_check_branch
          %287 = sbr.rel (%p285) target = $region48
        $region47: #{tpu_custom_call.1} parent=43 // pred_region
          %s288 = sand.u32 %s92, 1
          %s289 = scalar_lea.sflag [#allocation4], %s288
          %s290 = sand.u32 %s92, 1
          %s291 = smul.addr %s290, 8
          %s292 = scalar_lea.vmem [#allocation7], %s291
          %294 = dma.done %s289, 128
        $region48: #{tpu_custom_call.1} parent=43 // pred_fallthru
          _
      $region44: #{tpu_custom_call.1} parent=5 // pred_fallthru
        _
    $region6: #{tpu_custom_call.1} parent=1 // loop_footer
      %s19 = sadd.s32 1, %s15
    $region7: #{tpu_custom_call.1} parent=1 // loop_footer_branch
      %14 = sbr.rel target = $region3
    $region8: #{tpu_custom_call.1} parent=1 // loop_exit
      _
    %295 = vsyncpa [#allocation3], 1
    %s296 = scalar_lea.sflag [#allocation3], 1
    %297 = vsyncpa %s296, 1
    %298 = vsyncpa [#allocation6], 1
    %s299 = scalar_lea.sflag [#allocation6], 1
    %300 = vsyncpa %s299, 1
    %301 = vsyncpa [#allocation4], 1
    %s302 = scalar_lea.sflag [#allocation4], 1
    %303 = vsyncpa %s302, 1

</llo_original>
